<compile_context>
chip_gen: v5e
topology: v5e:2x2
jax: 0.10.0
libtpu: 0.0.40
codegen_flags: <defaults>
</compile_context>

<pallas_src>
import functools
import math

import jax
import jax.numpy as jnp
from jax.experimental import pallas as pl
from jax.experimental.pallas import tpu as pltpu

GEM_EPS = 1e-6
BN_EPS = 1e-5
_INV_SQRT2 = 1.0 / math.sqrt(2.0)


def _encoder_kernel(p_ref, x_ref, w_ref, b_ref, o_ref, acc_ref, *, inv_hw):
    """GeM pooling (grid-accumulated over spatial tiles) + fused Linear/BN/GELU.

    p_ref:   (1,)          f32 SMEM  GeM exponent p
    x_ref:   (TB, TS, C)   f32 VMEM  feature-map tile, channels on lanes
    w_ref:   (C, E_pad)    f32 VMEM  linear weight with BatchNorm folded in
    b_ref:   (1, E_pad)    f32 VMEM  linear bias with BatchNorm folded in
    o_ref:   (TB, E_pad)   f32 VMEM  output tile (resident across spatial axis)
    acc_ref: (TB, C)       f32 VMEM  running sum of clamp(x, eps)^p
    """
    si = pl.program_id(1)

    @pl.when(si == 0)
    def _():
        acc_ref[...] = jnp.zeros_like(acc_ref)

    p = p_ref[0]

    # ---- GeM: accumulate sum over this spatial tile of clamp(x, eps)^p ----
    x = jnp.maximum(x_ref[...], GEM_EPS)                 # (TB, TS, C)
    xp = jnp.exp(p * jnp.log(x))                         # x ** p (x >= eps > 0)
    acc_ref[...] += jnp.sum(xp, axis=1)                  # (TB, C)

    # ---- finalize on the last spatial tile ----
    @pl.when(si == pl.num_programs(1) - 1)
    def _():
        pooled = acc_ref[...] * inv_hw                   # mean over H*W
        pooled = jnp.exp(jnp.log(pooled) * (1.0 / p))    # ** (1 / p)

        # Linear (BatchNorm already folded into w/b on the host).
        y = jnp.dot(pooled, w_ref[...], preferred_element_type=jnp.float32)
        y = y + b_ref[...]

        # Exact (erf) GELU — PyTorch nn.GELU() default.
        y = 0.5 * y * (1.0 + jax.lax.erf(y * _INV_SQRT2))

        # Dropout(0.1) is identity in eval mode.
        o_ref[...] = y


def _pick_batch_tile(B, max_tb=8):
    """Largest divisor of B that is a multiple of 8 (or B itself) <= max_tb."""
    if B <= max_tb:
        return B
    cands = [t for t in range(8, min(B, max_tb) + 1, 8) if B % t == 0]
    return max(cands) if cands else B


def _pick_spatial_tile(S, per_row_bytes, budget_bytes):
    """Largest divisor of S that is a multiple of 8 (or S itself) within budget."""
    max_ts = max(1, budget_bytes // per_row_bytes)
    if S <= max_ts:
        return S
    cands = [t for t in range(8, min(S, max_ts) + 1, 8) if S % t == 0]
    return max(cands) if cands else S


def encoder_forward_nhwc(feat_bsc, params, *, spatial_tile_bytes=4 << 20):
    """feat_bsc: (B, H*W, C) float32 — last backbone feature map, channels last."""
    B, S, C = feat_bsc.shape
    E = params["b"].shape[0]

    # ---- fold BatchNorm1d (eval, running stats) into the Linear on the host ----
    scale = params["bn_gamma"] * jax.lax.rsqrt(params["bn_var"] + BN_EPS)
    w_folded = params["w"].T * scale[None, :]                          # (C, E)
    b_folded = (params["b"] - params["bn_mean"]) * scale + params["bn_beta"]

    # Pad E to a lane-dense multiple of 128 for unmasked output stores.
    E_pad = max(128, ((E + 127) // 128) * 128)
    if E_pad != E:
        w_folded = jnp.pad(w_folded, ((0, 0), (0, E_pad - E)))
        b_folded = jnp.pad(b_folded, (0, E_pad - E))
    b_folded = b_folded.reshape(1, E_pad)

    # ---- tile selection (keep pipelined input blocks modest for v7x VMEM) ----
    TB = _pick_batch_tile(B)
    TS = _pick_spatial_tile(S, per_row_bytes=TB * C * 4,
                            budget_bytes=spatial_tile_bytes)
    grid = (B // TB, S // TS)
    inv_hw = 1.0 / float(S)

    kernel = functools.partial(_encoder_kernel, inv_hw=inv_hw)

    # Rough VMEM footprint (double-buffered blocks + scratch) with headroom,
    # kept well under v7x's 64 MiB physical VMEM.
    vmem_bytes = (2 * TB * TS * C + 2 * C * E_pad + 2 * E_pad
                  + 2 * TB * E_pad + TB * C) * 4
    vmem_limit = int(min(max(2 * vmem_bytes, 16 << 20), 48 << 20))

    cost = pl.CostEstimate(
        flops=2 * B * C * E_pad,
        transcendentals=2 * B * S * C,                   # exp+log per element
        bytes_accessed=4 * (B * S * C + C * E_pad + B * E_pad),
    )

    out = pl.pallas_call(
        kernel,
        out_shape=jax.ShapeDtypeStruct((B, E_pad), jnp.float32),
        grid_spec=pltpu.PrefetchScalarGridSpec(
            num_scalar_prefetch=0,
            grid=grid,
            in_specs=[
                pl.BlockSpec(memory_space=pltpu.MemorySpace.SMEM),      # p
                pl.BlockSpec((TB, TS, C), lambda bi, si: (bi, si, 0)),  # x
                pl.BlockSpec((C, E_pad), lambda bi, si: (0, 0)),        # w
                pl.BlockSpec((1, E_pad), lambda bi, si: (0, 0)),        # b
            ],
            out_specs=pl.BlockSpec((TB, E_pad), lambda bi, si: (bi, 0)),
            scratch_shapes=[pltpu.VMEM((TB, C), jnp.float32)],
        ),
        compiler_params=pltpu.CompilerParams(
            dimension_semantics=("parallel", "arbitrary"),
            vmem_limit_bytes=vmem_limit,
        ),
        cost_estimate=cost,
    )(params["p"].reshape(1).astype(jnp.float32), feat_bsc, w_folded, b_folded)

    return out[:, :E] if E_pad != E else out


def encoder_forward(feat_nchw, params, **kwargs):
    """feat_nchw: (B, C, H, W) float32 — matches the PyTorch NCHW feature map."""
    B, C, H, W = feat_nchw.shape
    x = jnp.transpose(feat_nchw, (0, 2, 3, 1)).reshape(B, H * W, C)
    return encoder_forward_nhwc(x, params, **kwargs)


def init_params(key, feat_dim, embedding):
    kw, kb = jax.random.split(key)
    # nn.Linear default init: U(-1/sqrt(fan_in), 1/sqrt(fan_in))
    bound = 1.0 / math.sqrt(feat_dim)
    return {
        "p": jnp.full((1,), 3.0, jnp.float32),                       # GeM p
        "w": jax.random.uniform(kw, (embedding, feat_dim), jnp.float32,
                                -bound, bound),
        "b": jax.random.uniform(kb, (embedding,), jnp.float32, -bound, bound),
        "bn_gamma": jnp.ones((embedding,), jnp.float32),
        "bn_beta": jnp.zeros((embedding,), jnp.float32),
        "bn_mean": jnp.zeros((embedding,), jnp.float32),
        "bn_var": jnp.ones((embedding,), jnp.float32),
    }


def reference_forward(feat_nchw, params):
    """Pure-JAX reference (PyTorch eval-mode semantics) for correctness check."""
    p = params["p"][0]
    x = jnp.maximum(feat_nchw, GEM_EPS) ** p
    pooled = jnp.mean(x, axis=(2, 3)) ** (1.0 / p)               # (B, C)
    y = pooled @ params["w"].T + params["b"]
    y = ((y - params["bn_mean"]) / jnp.sqrt(params["bn_var"] + BN_EPS)
         * params["bn_gamma"] + params["bn_beta"])
    return 0.5 * y * (1.0 + jax.lax.erf(y / math.sqrt(2.0)))


if __name__ == "__main__":
    # Small shapes: B=2, C=128 (lane-dense), 16x16 feature map, embedding=64
    # (exercises the E->128 padding path). The small spatial-tile budget forces
    # S=256 to split into 4 pipelined tiles so the accumulation path is tested.
    B, C, H, W = 2, 128, 16, 16
    EMB = 64

    key = jax.random.PRNGKey(0)
    k_feat, k_par = jax.random.split(key)
    feat = jax.random.normal(k_feat, (B, C, H, W), jnp.float32)
    params = init_params(k_par, C, EMB)

    out = encoder_forward(feat, params, spatial_tile_bytes=64 * 1024)
    out = jax.block_until_ready(out)

    ref = reference_forward(feat, params)
    assert out.shape == (B, EMB)
    assert jnp.allclose(out, ref, atol=1e-3, rtol=1e-3), "mismatch vs reference"
    print("KERNEL_OK")
</pallas_src>

<mosaic_0001>
module attributes {stable_mosaic.version = 11 : i64} {
  func.func @_encoder_kernel(%arg0: i32, %arg1: i32, %arg2: memref<1xf32, #tpu.memory_space<smem>>, %arg3: memref<2x64x128xf32, #tpu.memory_space<vmem>>, %arg4: memref<128x128xf32, #tpu.memory_space<vmem>>, %arg5: memref<1x128xf32, #tpu.memory_space<vmem>>, %arg6: memref<2x128xf32, #tpu.memory_space<vmem>>, %arg7: memref<2x128xf32, #tpu.memory_space<vmem>>) attributes {dimension_semantics = [#tpu.dimension_semantics<parallel>, #tpu.dimension_semantics<arbitrary>], iteration_bounds = array<i64: 1, 4>, scalar_prefetch = 0 : i64, scratch_operands = 1 : i64, tpu.core_type = #tpu.core_type<tc>, window_params = [{transform_indices = @transform_0, window_bounds = array<i64: 1>}, {transform_indices = @transform_1, window_bounds = array<i64: 2, 64, 128>}, {pipeline_mode = #tpu.pipeline_mode<synchronous>, transform_indices = @transform_2, window_bounds = array<i64: 128, 128>}, {pipeline_mode = #tpu.pipeline_mode<synchronous>, transform_indices = @transform_3, window_bounds = array<i64: 1, 128>}, {transform_indices = @transform_4, window_bounds = array<i64: 2, 128>}]} {
    %c0_i32 = arith.constant 0 : i32
    %0 = arith.cmpi eq, %arg1, %c0_i32 : i32
    %1 = arith.extui %0 : i1 to i32
    %c0_i32_0 = arith.constant 0 : i32
    %2 = arith.cmpi ne, %1, %c0_i32_0 : i32
    scf.if %2 {
      %cst_10 = arith.constant 0.000000e+00 : f32
      %18 = vector.broadcast %cst_10 : f32 to vector<2x128xf32>
      %c0_11 = arith.constant 0 : index
      %c0_12 = arith.constant 0 : index
      %19 = vector.load %arg7[%c0_11, %c0_12] : memref<2x128xf32, #tpu.memory_space<vmem>>, vector<2x128xf32>
      tpu.vector_store %arg7[%c0_11, %c0_12], %18 {strides = array<i32>} : memref<2x128xf32, #tpu.memory_space<vmem>>, vector<2x128xf32>,
    } else {
    }
    %c0 = arith.constant 0 : index
    %3 = memref.load %arg2[%c0] : memref<1xf32, #tpu.memory_space<smem>>
    %c0_1 = arith.constant 0 : index
    %c0_2 = arith.constant 0 : index
    %c0_3 = arith.constant 0 : index
    %4 = vector.load %arg3[%c0_1, %c0_2, %c0_3] : memref<2x64x128xf32, #tpu.memory_space<vmem>>, vector<2x64x128xf32>
    %cst = arith.constant 9.99999997E-7 : f32
    %5 = vector.broadcast %cst : f32 to vector<2x64x128xf32>
    %6 = arith.maximumf %4, %5 : vector<2x64x128xf32>
    %7 = math.log %6 : vector<2x64x128xf32>
    %8 = vector.broadcast %3 : f32 to vector<2x64x128xf32>
    %9 = arith.mulf %8, %7 : vector<2x64x128xf32>
    %10 = math.exp %9 : vector<2x64x128xf32>
    %c0_4 = arith.constant 0 : index
    %c0_5 = arith.constant 0 : index
    %11 = vector.load %arg7[%c0_4, %c0_5] : memref<2x128xf32, #tpu.memory_space<vmem>>, vector<2x128xf32>
    %cst_6 = arith.constant dense<0.000000e+00> : vector<2x128xf32>
    %12 = vector.multi_reduction <add>, %10, %cst_6 [1] : vector<2x64x128xf32> to vector<2x128xf32>
    %13 = arith.addf %11, %12 : vector<2x128xf32>
    %c0_7 = arith.constant 0 : index
    %c0_8 = arith.constant 0 : index
    %14 = vector.load %arg7[%c0_7, %c0_8] : memref<2x128xf32, #tpu.memory_space<vmem>>, vector<2x128xf32>
    tpu.vector_store %arg7[%c0_7, %c0_8], %13 {strides = array<i32>} : memref<2x128xf32, #tpu.memory_space<vmem>>, vector<2x128xf32>,
    %c3_i32 = arith.constant 3 : i32
    %15 = arith.cmpi eq, %arg1, %c3_i32 : i32
    %16 = arith.extui %15 : i1 to i32
    %c0_i32_9 = arith.constant 0 : i32
    %17 = arith.cmpi ne, %16, %c0_i32_9 : i32
    scf.if %17 {
      %c0_10 = arith.constant 0 : index
      %c0_11 = arith.constant 0 : index
      %18 = vector.load %arg7[%c0_10, %c0_11] : memref<2x128xf32, #tpu.memory_space<vmem>>, vector<2x128xf32>
      %cst_12 = arith.constant 3.906250e-03 : f32
      %19 = vector.broadcast %cst_12 : f32 to vector<2x128xf32>
      %20 = arith.mulf %18, %19 : vector<2x128xf32>
      %21 = math.log %20 : vector<2x128xf32>
      %cst_13 = arith.constant 1.000000e+00 : f32
      %22 = arith.divf %cst_13, %3 : f32
      %23 = vector.broadcast %22 : f32 to vector<2x128xf32>
      %24 = arith.mulf %21, %23 : vector<2x128xf32>
      %25 = math.exp %24 : vector<2x128xf32>
      %c0_14 = arith.constant 0 : index
      %c0_15 = arith.constant 0 : index
      %26 = vector.load %arg4[%c0_14, %c0_15] : memref<128x128xf32, #tpu.memory_space<vmem>>, vector<128x128xf32>
      %cst_16 = arith.constant dense<0.000000e+00> : vector<2x128xf32>
      %27 = tpu.matmul %25, %26, %cst_16 {dimension_numbers = #tpu.dot_dimension_numbers<[1], [0], [0], [1], [0, 0, 1, 1], [], []>} : vector<2x128xf32>, vector<128x128xf32>, vector<2x128xf32> -> vector<2x128xf32>
      %c0_17 = arith.constant 0 : index
      %c0_18 = arith.constant 0 : index
      %28 = vector.load %arg5[%c0_17, %c0_18] : memref<1x128xf32, #tpu.memory_space<vmem>>, vector<1x128xf32>
      %29 = vector.broadcast %28 : vector<1x128xf32> to vector<2x128xf32>
      %30 = arith.addf %27, %29 : vector<2x128xf32>
      %cst_19 = arith.constant 5.000000e-01 : f32
      %31 = vector.broadcast %cst_19 : f32 to vector<2x128xf32>
      %32 = arith.mulf %31, %30 : vector<2x128xf32>
      %cst_20 = arith.constant 0.707106769 : f32
      %33 = vector.broadcast %cst_20 : f32 to vector<2x128xf32>
      %34 = arith.mulf %30, %33 : vector<2x128xf32>
      %35 = math.erf %34 : vector<2x128xf32>
      %cst_21 = arith.constant 1.000000e+00 : f32
      %36 = vector.broadcast %cst_21 : f32 to vector<2x128xf32>
      %37 = arith.addf %36, %35 : vector<2x128xf32>
      %38 = arith.mulf %32, %37 : vector<2x128xf32>
      %c0_22 = arith.constant 0 : index
      %c0_23 = arith.constant 0 : index
      %39 = vector.load %arg6[%c0_22, %c0_23] : memref<2x128xf32, #tpu.memory_space<vmem>>, vector<2x128xf32>
      tpu.vector_store %arg6[%c0_22, %c0_23], %38 {strides = array<i32>} : memref<2x128xf32, #tpu.memory_space<vmem>>, vector<2x128xf32>,
    } else {
    }
    return
  }
  func.func @transform_0(%arg0: i32, %arg1: i32) -> i32 {
    %c0_i32 = arith.constant 0 : i32
    %c0_i32_0 = arith.constant 0 : i32
    return %c0_i32 : i32
  }
  func.func @transform_1(%arg0: i32, %arg1: i32) -> (i32, i32, i32) {
    %c0_i32 = arith.constant 0 : i32
    %c0_i32_0 = arith.constant 0 : i32
    return %arg0, %arg1, %c0_i32 : i32, i32, i32
  }
  func.func @transform_2(%arg0: i32, %arg1: i32) -> (i32, i32) {
    %c0_i32 = arith.constant 0 : i32
    %c0_i32_0 = arith.constant 0 : i32
    %c0_i32_1 = arith.constant 0 : i32
    return %c0_i32, %c0_i32_0 : i32, i32
  }
  func.func @transform_3(%arg0: i32, %arg1: i32) -> (i32, i32) {
    %c0_i32 = arith.constant 0 : i32
    %c0_i32_0 = arith.constant 0 : i32
    %c0_i32_1 = arith.constant 0 : i32
    return %c0_i32, %c0_i32_0 : i32, i32
  }
  func.func @transform_4(%arg0: i32, %arg1: i32) -> (i32, i32) {
    %c0_i32 = arith.constant 0 : i32
    %c0_i32_0 = arith.constant 0 : i32
    return %arg0, %c0_i32 : i32, i32
  }
}

</mosaic_0001>

<llo_original>
// kernel: tpu_custom_call.1
$region0: #{tpu_custom_call.1}
  #allocation0 [shape = 'u32[]', space=smem, size = 0x4, offset = 0x4, fixed_abs, tag = 'smem constant byte address 0x4 - core index']
  #allocation1 [shape = 'u32[72,128]{1,0:T(1,128)}', space=vmem, size = 0x9000, scoped, tag = 'internal scratch']
  #allocation2 [shape = 'f32[2,128]{1,0:T(2,128)}', space=vmem, size = 0x400, scoped, tag = 'scratch operand']
  #allocation3 [shape = 'f32[1]{0:T(128)S(6)}', space=smem, size = 0x200, scoped, tag = 'scoped memory for tpu_custom_call.1']
  #allocation10 [shape = 's32[]', space=sflag, size = 0x4, offset = 0, fixed_abs, tag = 'sflag constant byte address 0x0 - dummy sync flag']
  %s0 = inlined_call_operand.<no memory space> [shape: f32[1], index: 0, kind: input, shape index: {}]
  %s1 = inlined_call_operand.hbm [shape: f32[2,256,128], index: 1, kind: input, shape index: {}]
  %s2 = inlined_call_operand.hbm [shape: f32[128,128], index: 2, kind: input, shape index: {}]
  %s3 = inlined_call_operand.vmem [shape: f32[1,128], index: 3, kind: input, shape index: {}]
  %s4 = inlined_call_operand.hbm [shape: f32[2,128], index: 4, kind: output, shape index: {}]
  %s5 = sld [smem:[#allocation0]]
  $region65: #{tpu_custom_call.1} parent=0
    _
  %s7 = ssub.s32 1, %s5
  %s8 = scalar_select 0, %s7, %s5
  %9 = sst [smem:[#allocation3]] %s0
  $region1: #{tpu_custom_call.1} parent=0
    #allocation4 [shape = 'u8[131072]{0}', space=vmem, size = 0x20000, scoped, tag = 'input window, operand 1']
    #allocation5 [shape = 's32[2]{0}', space=sflag, size = 0x8, scoped, tag = 'scoped memory for tpu_custom_call.1']
    #allocation6 [shape = 's32[2]{0}', space=sflag, size = 0x8, scoped, tag = 'scoped memory for tpu_custom_call.1']
    #allocation7 [shape = 'u8[65536]{0}', space=vmem, size = 0x10000, scoped, tag = 'input window, operand 2, single buffered']
    #allocation8 [shape = 's32[1]{0}', space=sflag, size = 0x4, scoped, tag = 'scoped memory for tpu_custom_call.1']
    #allocation9 [shape = 'u8[1024]{0}', space=vmem, size = 0x400, scoped, tag = 'output window, operand 0, single buffered']
    %10 = vsyncpa [#allocation5], 0
    %s11 = scalar_lea.sflag [#allocation5], 1
    %12 = vsyncpa %s11, 0
    %13 = vsyncpa [#allocation8], 0
    %14 = vsyncpa [#allocation6], 0
    loop: start=0, step=1, limit=6
    $region2: #{tpu_custom_call.1} parent=1 // loop_pre_header
      _
    $region3: #{tpu_custom_call.1} parent=1 // loop_header
      %s16 = sphi 0, %s20
      %p17 = scmp.ge.s32.totalorder %s16, 6
      %s23 = sphi 0, %s35
      %s24 = sphi 0, %s31
      %s25 = sphi 0, %s23
      %s26 = sphi 0, %s24
      %s27 = sphi 0, %s25
      %s28 = sphi 0, %s26
      %s36 = sphi 0, %s36
      %s38 = sphi 0, %s36
      %s39 = sphi 0, %s38
      %s53 = sphi 0, %s39
      %s61 = sphi 0, %s63
      %s64 = sphi 0, %s61
      %s65 = sphi 0, %s64
      %s81 = sphi 0, %s65
      %s85 = sphi 0, %s85
      %s87 = sphi 0, %s85
      %s88 = sphi 0, %s87
      %s102 = sphi 0, %s88
      %s106 = sphi 0, %s106
      %s108 = sphi 0, %s106
      %s109 = sphi 0, %s108
      %s123 = sphi 0, %s109
      %s129 = sphi 0, %s131
      %s132 = sphi 0, %s129
      %s133 = sphi 0, %s132
      %s149 = sphi 0, %s133
    $region4: #{tpu_custom_call.1} parent=1 // loop_header_branch
      %19 = sbr.rel (%p17) target = $region8
    $region5: #{tpu_custom_call.1} parent=1 // loop_body
      %s21 = ssub.s32 %s16, 1
      %s22 = ssub.s32 %s16, 2
      %s29 = sadd.s32 1, %s24
      %p30 = scmp.ge.s32.totalorder %s29, 4
      %s31 = scalar_select %p30, 0, %s29
      %s32 = sadd.s32 1, %s23
      %s33 = scalar_select %p30, %s32, %s23
      %p34 = scmp.ge.s32.totalorder %s33, 1
      %s35 = scalar_select %p34, 0, %s33
      %s37 = sadd.s32 %s36, 1
      %p40 = scmp.eq.s32.totalorder %s16, 3
      %p41 = scmp.ne.s32.totalorder %s36, %s38
      %p42 = scmp.eq.s32.totalorder %s16, 0
      %p43 = por %p41, %p42
      %p44 = scmp.ne.s32.totalorder %s36, %s38
      %p45 = scmp.eq.s32.totalorder %s21, 3
      %p46 = por %p44, %p45
      %p47 = scmp.ne.s32.totalorder %s38, %s39
      %p48 = scmp.eq.s32.totalorder %s21, 0
      %p49 = por %p47, %p48
      %p50 = scmp.ne.s32.totalorder %s38, %s39
      %p51 = scmp.eq.s32.totalorder %s22, 3
      %p52 = por %p50, %p51
      %p54 = scmp.ne.s32.totalorder %s39, %s53
      %p55 = scmp.eq.s32.totalorder %s22, 0
      %p56 = por %p54, %p55
      %s57 = ssub.s32 %s23, %s35
      %s58 = ssub.s32 %s24, %s31
      %s59 = sor.u32 %s57, %s58
      %p60 = scmp.eq.s32.totalorder %s59, 0
      %s62 = sadd.s32 %s61, 1
      %s63 = scalar_select %p60, %s61, %s62
      %p66 = pneg %p60
      %p67 = scmp.eq.s32.totalorder %s16, 3
      %p68 = por %p66, %p67
      %p69 = scmp.ne.s32.totalorder %s61, %s64
      %p70 = scmp.eq.s32.totalorder %s16, 0
      %p71 = por %p69, %p70
      %p72 = scmp.ne.s32.totalorder %s61, %s64
      %p73 = scmp.eq.s32.totalorder %s21, 3
      %p74 = por %p72, %p73
      %p75 = scmp.ne.s32.totalorder %s64, %s65
      %p76 = scmp.eq.s32.totalorder %s21, 0
      %p77 = por %p75, %p76
      %p78 = scmp.ne.s32.totalorder %s64, %s65
      %p79 = scmp.eq.s32.totalorder %s22, 3
      %p80 = por %p78, %p79
      %p82 = scmp.ne.s32.totalorder %s65, %s81
      %p83 = scmp.eq.s32.totalorder %s22, 0
      %p84 = por %p82, %p83
      %s86 = sadd.s32 %s85, 1
      %p89 = scmp.eq.s32.totalorder %s16, 3
      %p90 = scmp.ne.s32.totalorder %s85, %s87
      %p91 = scmp.eq.s32.totalorder %s16, 0
      %p92 = por %p90, %p91
      %p93 = scmp.ne.s32.totalorder %s85, %s87
      %p94 = scmp.eq.s32.totalorder %s21, 3
      %p95 = por %p93, %p94
      %p96 = scmp.ne.s32.totalorder %s87, %s88
      %p97 = scmp.eq.s32.totalorder %s21, 0
      %p98 = por %p96, %p97
      %p99 = scmp.ne.s32.totalorder %s87, %s88
      %p100 = scmp.eq.s32.totalorder %s22, 3
      %p101 = por %p99, %p100
      %p103 = scmp.ne.s32.totalorder %s88, %s102
      %p104 = scmp.eq.s32.totalorder %s22, 0
      %p105 = por %p103, %p104
      %s107 = sadd.s32 %s106, 1
      %p110 = scmp.eq.s32.totalorder %s16, 3
      %p111 = scmp.ne.s32.totalorder %s106, %s108
      %p112 = scmp.eq.s32.totalorder %s16, 0
      %p113 = por %p111, %p112
      %p114 = scmp.ne.s32.totalorder %s106, %s108
      %p115 = scmp.eq.s32.totalorder %s21, 3
      %p116 = por %p114, %p115
      %p117 = scmp.ne.s32.totalorder %s108, %s109
      %p118 = scmp.eq.s32.totalorder %s21, 0
      %p119 = por %p117, %p118
      %p120 = scmp.ne.s32.totalorder %s108, %s109
      %p121 = scmp.eq.s32.totalorder %s22, 3
      %p122 = por %p120, %p121
      %p124 = scmp.ne.s32.totalorder %s109, %s123
      %p125 = scmp.eq.s32.totalorder %s22, 0
      %p126 = por %p124, %p125
      %s127 = ssub.s32 %s23, %s35
      %p128 = scmp.eq.s32.totalorder %s127, 0
      %s130 = sadd.s32 %s129, 1
      %s131 = scalar_select %p128, %s129, %s130
      %p134 = pneg %p128
      %p135 = scmp.eq.s32.totalorder %s16, 3
      %p136 = por %p134, %p135
      %p137 = scmp.ne.s32.totalorder %s129, %s132
      %p138 = scmp.eq.s32.totalorder %s16, 0
      %p139 = por %p137, %p138
      %p140 = scmp.ne.s32.totalorder %s129, %s132
      %p141 = scmp.eq.s32.totalorder %s21, 3
      %p142 = por %p140, %p141
      %p143 = scmp.ne.s32.totalorder %s132, %s133
      %p144 = scmp.eq.s32.totalorder %s21, 0
      %p145 = por %p143, %p144
      %p146 = scmp.ne.s32.totalorder %s132, %s133
      %p147 = scmp.eq.s32.totalorder %s22, 3
      %p148 = por %p146, %p147
      %p150 = scmp.ne.s32.totalorder %s133, %s149
      %p151 = scmp.eq.s32.totalorder %s22, 0
      %p152 = por %p150, %p151
      %p153 = scmp.le.s32.totalorder 1, %s16
      %p154 = scmp.lt.s32.totalorder %s16, 5
      %p155 = pnand %p153, %p154
      %p156 = pneg %p155
      // Predicated region
      $region9: #{tpu_custom_call.1} parent=5 // pred_check
        _
      $region10: #{tpu_custom_call.1} parent=5 // pred_check_branch
        %158 = sbr.rel (%p155) target = $region12
      $region11: #{tpu_custom_call.1} parent=5 // pred_region
        %s159 = ssub.s32 %s16, 1
        // Predicated region
        $region13: #{tpu_custom_call.1} parent=11 // pred_check
          %p160 = pneg %p49
        $region14: #{tpu_custom_call.1} parent=11 // pred_check_branch
          %162 = sbr.rel (%p160) target = $region16
        $region15: #{tpu_custom_call.1} parent=11 // pred_region
          _
        $region16: #{tpu_custom_call.1} parent=11 // pred_fallthru
          _
        // Predicated region
        $region17: #{tpu_custom_call.1} parent=11 // pred_check
          %p163 = pneg %p98
        $region18: #{tpu_custom_call.1} parent=11 // pred_check_branch
          %165 = sbr.rel (%p163) target = $region20
        $region19: #{tpu_custom_call.1} parent=11 // pred_region
          %167 = vsyncadd [#allocation8], 0
          %s168 = sshll.u32 %s2, 4
          %s169 = int_to_ptr.hbm [resolvable:$true] %s168
          %s170 = sshll.u32 [#allocation7], 4
          %s171 = int_to_ptr.vmem [resolvable:$true] %s170
          %176 = dma.hbm_to_vmem [thread:$0]  %s169, 2048, %s171, [#allocation8], 128, 128, 8
        $region20: #{tpu_custom_call.1} parent=11 // pred_fallthru
          _
        // Predicated region
        $region21: #{tpu_custom_call.1} parent=11 // pred_check
          %p177 = pneg %p119
        $region22: #{tpu_custom_call.1} parent=11 // pred_check_branch
          %179 = sbr.rel (%p177) target = $region24
        $region23: #{tpu_custom_call.1} parent=11 // pred_region
          _
        $region24: #{tpu_custom_call.1} parent=11 // pred_fallthru
          _
      $region12: #{tpu_custom_call.1} parent=5 // pred_fallthru
        _
      %p180 = scmp.lt.s32.totalorder %s16, 4
      // Predicated region
      $region25: #{tpu_custom_call.1} parent=5 // pred_check
        %p181 = pneg %p180
      $region26: #{tpu_custom_call.1} parent=5 // pred_check_branch
        %183 = sbr.rel (%p181) target = $region28
      $region27: #{tpu_custom_call.1} parent=5 // pred_region
        // Predicated region
        $region29: #{tpu_custom_call.1} parent=27 // pred_check
          %p184 = pneg %p71
        $region30: #{tpu_custom_call.1} parent=27 // pred_check_branch
          %186 = sbr.rel (%p184) target = $region32
        $region31: #{tpu_custom_call.1} parent=27 // pred_region
          #allocation11 [shape = 'u32[6]{0}', space=smem, size = 0x18, scoped, tag = 'DMA stride descriptor']
          %s187 = sand.u32 %s61, 1
          %s188 = scalar_lea.sflag [#allocation5], %s187
          %s189 = sand.u32 %s61, 1
          %s190 = smul.addr %s189, 128
          %s191 = scalar_lea.vmem [#allocation4], %s190
          %s192 = smul.u32 2, %s23
          %s193 = smul.u32 8, %s24
          %195 = vsyncadd %s188, 0
          %s196 = smul.addr %s192, 32
          %s197 = sadd.s32 %s193, %s196
          %s198 = smul.addr %s197, 8
          %s199 = scalar_lea.hbm %s1, %s198
          %s201 = sshll.u32 1, 14
          %s202 = sxor.u32 4294967295, %s201
          %s204 = sld [smem:[#allocation0]]
          %s205 = sadd.s32 2, %s204
          %s207 = sshll.u32 7, 26
          %s208 = sxor.u32 4294967295, %s207
          %s209 = sand.u32 0, %s208
          %s210 = sshll.u32 %s205, 26
          %s211 = sor.u32 %s209, %s210
          %s212 = sshll.u32 %s199, 4
          %s213 = int_to_ptr.hbm [resolvable:$true] %s212
          %s214 = sshll.u32 %s191, 4
          %s215 = int_to_ptr.vmem [resolvable:$true] %s214
          %221 = sst [smem:[#allocation11]] 4096
          %s222 = scalar_lea.smem [#allocation11], 1
          %223 = sst [smem:[%s222]] 1024
          %s224 = scalar_lea.smem [#allocation11], 2
          %225 = sst [smem:[%s224]] 8
          %s226 = scalar_lea.smem [#allocation11], 3
          %227 = sst [smem:[%s226]] 128
          %s228 = scalar_lea.smem [#allocation11], 4
          %229 = sst [smem:[%s228]] 128
          %s230 = scalar_lea.smem [#allocation11], 5
          %231 = sst [smem:[%s230]] 8
          %233 = dma.general %s213, 2048, %s215, %s188, [#allocation10], [#allocation11], %s211, 0
        $region32: #{tpu_custom_call.1} parent=27 // pred_fallthru
          _
      $region28: #{tpu_custom_call.1} parent=5 // pred_fallthru
        _
      %p234 = scmp.le.s32.totalorder 1, %s16
      %p235 = scmp.lt.s32.totalorder %s16, 5
      %p236 = pnand %p234, %p235
      %p237 = pneg %p236
      // Predicated region
      $region33: #{tpu_custom_call.1} parent=5 // pred_check
        _
      $region34: #{tpu_custom_call.1} parent=5 // pred_check_branch
        %239 = sbr.rel (%p236) target = $region36
      $region35: #{tpu_custom_call.1} parent=5 // pred_region
        %s240 = ssub.s32 %s16, 1
        %s241 = sand.u32 %s64, 1
        %s242 = scalar_lea.sflag [#allocation5], %s241
        %s243 = sand.u32 %s64, 1
        %s244 = smul.addr %s243, 128
        %s245 = scalar_lea.vmem [#allocation4], %s244
        // Predicated region
        $region37: #{tpu_custom_call.1} parent=35 // pred_check
          %p246 = pneg %p77
        $region38: #{tpu_custom_call.1} parent=35 // pred_check_branch
          %248 = sbr.rel (%p246) target = $region40
        $region39: #{tpu_custom_call.1} parent=35 // pred_region
          %250 = dma.done %s242, 2048
        $region40: #{tpu_custom_call.1} parent=35 // pred_fallthru
          _
        // Predicated region
        $region41: #{tpu_custom_call.1} parent=35 // pred_check
          %p251 = pneg %p98
        $region42: #{tpu_custom_call.1} parent=35 // pred_check_branch
          %253 = sbr.rel (%p251) target = $region44
        $region43: #{tpu_custom_call.1} parent=35 // pred_region
          %255 = dma.done [#allocation8], 2048
        $region44: #{tpu_custom_call.1} parent=35 // pred_fallthru
          _
        %p256 = pneg %p49
        %p257 = pneg %p46
        %s258 = sand.u32 %s64, 1
        %s259 = scalar_lea.sflag [#allocation5], %s258
        %s260 = sand.u32 %s64, 1
        %s261 = smul.addr %s260, 128
        %s262 = scalar_lea.vmem [#allocation4], %s261
        %p263 = pneg %p77
        %p264 = pneg %p74
        %p265 = pneg %p98
        %p266 = pneg %p95
        %p267 = pneg %p119
        %p268 = pneg %p116
        %p269 = pneg %p145
        %p270 = pneg %p142
        %s271 = smul.u32 2, %s25
        %s272 = smul.u32 8, %s26
        %p273 = scmp.eq.s32.totalorder %s26, 0
        // Predicated region
        $region45: #{tpu_custom_call.1} parent=35 // pred_check
          %p274 = pneg %p273
        $region46: #{tpu_custom_call.1} parent=35 // pred_check_branch
          %276 = sbr.rel (%p274) target = $region48
        $region47: #{tpu_custom_call.1} parent=35 // pred_region
          %277 = vst [vmem:[#allocation2] sm:$0x3] 0.0
        $region48: #{tpu_custom_call.1} parent=35 // pred_fallthru
          _
        %s278 = sld [smem:[#allocation3]]
        %v279 = vld [vmem:[%s245] sm:$0xff]
        %v280 = vld [vmem:[%s245 + $0x8] sm:$0xff]
        %v281 = vld [vmem:[%s245 + $0x10] sm:$0xff]
        %v282 = vld [vmem:[%s245 + $0x18] sm:$0xff]
        %v283 = vld [vmem:[%s245 + $0x20] sm:$0xff]
        %v284 = vld [vmem:[%s245 + $0x28] sm:$0xff]
        %v285 = vld [vmem:[%s245 + $0x30] sm:$0xff]
        %v286 = vld [vmem:[%s245 + $0x38] sm:$0xff]
        %v287 = vld [vmem:[%s245 + $0x40] sm:$0xff]
        %v288 = vld [vmem:[%s245 + $0x48] sm:$0xff]
        %v289 = vld [vmem:[%s245 + $0x50] sm:$0xff]
        %v290 = vld [vmem:[%s245 + $0x58] sm:$0xff]
        %v291 = vld [vmem:[%s245 + $0x60] sm:$0xff]
        %v292 = vld [vmem:[%s245 + $0x68] sm:$0xff]
        %v293 = vld [vmem:[%s245 + $0x70] sm:$0xff]
        %v294 = vld [vmem:[%s245 + $0x78] sm:$0xff]
        %v295 = vmax.f32 %v279, 1e-06
        %v296 = vmax.f32 %v280, 1e-06
        %v297 = vmax.f32 %v281, 1e-06
        %v298 = vmax.f32 %v282, 1e-06
        %v299 = vmax.f32 %v283, 1e-06
        %v300 = vmax.f32 %v284, 1e-06
        %v301 = vmax.f32 %v285, 1e-06
        %v302 = vmax.f32 %v286, 1e-06
        %v303 = vmax.f32 %v287, 1e-06
        %v304 = vmax.f32 %v288, 1e-06
        %v305 = vmax.f32 %v289, 1e-06
        %v306 = vmax.f32 %v290, 1e-06
        %v307 = vmax.f32 %v291, 1e-06
        %v308 = vmax.f32 %v292, 1e-06
        %v309 = vmax.f32 %v293, 1e-06
        %v310 = vmax.f32 %v294, 1e-06
        %v311 = vlog2.pop %v295
        %v312 = vmul.f32 %v311, 0.6931472
        %v313 = vlog2.pop %v296
        %v314 = vmul.f32 %v313, 0.6931472
        %v315 = vlog2.pop %v297
        %v316 = vmul.f32 %v315, 0.6931472
        %v317 = vlog2.pop %v298
        %v318 = vmul.f32 %v317, 0.6931472
        %v319 = vlog2.pop %v299
        %v320 = vmul.f32 %v319, 0.6931472
        %v321 = vlog2.pop %v300
        %v322 = vmul.f32 %v321, 0.6931472
        %v323 = vlog2.pop %v301
        %v324 = vmul.f32 %v323, 0.6931472
        %v325 = vlog2.pop %v302
        %v326 = vmul.f32 %v325, 0.6931472
        %v327 = vlog2.pop %v303
        %v328 = vmul.f32 %v327, 0.6931472
        %v329 = vlog2.pop %v304
        %v330 = vmul.f32 %v329, 0.6931472
        %v331 = vlog2.pop %v305
        %v332 = vmul.f32 %v331, 0.6931472
        %v333 = vlog2.pop %v306
        %v334 = vmul.f32 %v333, 0.6931472
        %v335 = vlog2.pop %v307
        %v336 = vmul.f32 %v335, 0.6931472
        %v337 = vlog2.pop %v308
        %v338 = vmul.f32 %v337, 0.6931472
        %v339 = vlog2.pop %v309
        %v340 = vmul.f32 %v339, 0.6931472
        %v341 = vlog2.pop %v310
        %v342 = vmul.f32 %v341, 0.6931472
        %v343 = vstv %s278
        %v344 = vmul.f32 %v343, %v312
        %v345 = vmul.f32 %v343, %v314
        %v346 = vmul.f32 %v343, %v316
        %v347 = vmul.f32 %v343, %v318
        %v348 = vmul.f32 %v343, %v320
        %v349 = vmul.f32 %v343, %v322
        %v350 = vmul.f32 %v343, %v324
        %v351 = vmul.f32 %v343, %v326
        %v352 = vmul.f32 %v343, %v328
        %v353 = vmul.f32 %v343, %v330
        %v354 = vmul.f32 %v343, %v332
        %v355 = vmul.f32 %v343, %v334
        %v356 = vmul.f32 %v343, %v336
        %v357 = vmul.f32 %v343, %v338
        %v358 = vmul.f32 %v343, %v340
        %v359 = vmul.f32 %v343, %v342
        %v360 = vmul.f32 %v344, 1.442695
        %v361 = vpow.pop %v360
        %v362 = vmul.f32 %v345, 1.442695
        %v363 = vpow.pop %v362
        %v364 = vmul.f32 %v346, 1.442695
        %v365 = vpow.pop %v364
        %v366 = vmul.f32 %v347, 1.442695
        %v367 = vpow.pop %v366
        %v368 = vmul.f32 %v348, 1.442695
        %v369 = vpow.pop %v368
        %v370 = vmul.f32 %v349, 1.442695
        %v371 = vpow.pop %v370
        %v372 = vmul.f32 %v350, 1.442695
        %v373 = vpow.pop %v372
        %v374 = vmul.f32 %v351, 1.442695
        %v375 = vpow.pop %v374
        %v376 = vmul.f32 %v352, 1.442695
        %v377 = vpow.pop %v376
        %v378 = vmul.f32 %v353, 1.442695
        %v379 = vpow.pop %v378
        %v380 = vmul.f32 %v354, 1.442695
        %v381 = vpow.pop %v380
        %v382 = vmul.f32 %v355, 1.442695
        %v383 = vpow.pop %v382
        %v384 = vmul.f32 %v356, 1.442695
        %v385 = vpow.pop %v384
        %v386 = vmul.f32 %v357, 1.442695
        %v387 = vpow.pop %v386
        %v388 = vmul.f32 %v358, 1.442695
        %v389 = vpow.pop %v388
        %v390 = vmul.f32 %v359, 1.442695
        %v391 = vpow.pop %v390
        %v392 = vld [vmem:[#allocation2] sm:$0x3]
        %v393 = vadd.f32 %v361, %v363
        %v394 = vadd.f32 %v393, %v365
        %v395 = vadd.f32 %v394, %v367
        %v396 = vadd.f32 %v395, %v369
        %v397 = vadd.f32 %v396, %v371
        %v398 = vadd.f32 %v397, %v373
        %v399 = vadd.f32 %v398, %v375
        %v400 = vrot.slane %v399, 4
        %v401 = vadd.f32 %v399, %v400
        %v402 = vrot.slane %v401, 2
        %v403 = vadd.f32 %v401, %v402
        %v404 = vrot.slane %v403, 1
        %v405 = vadd.f32 %v403, %v404
        %v406 = vadd.f32 %v377, %v379
        %v407 = vadd.f32 %v406, %v381
        %v408 = vadd.f32 %v407, %v383
        %v409 = vadd.f32 %v408, %v385
        %v410 = vadd.f32 %v409, %v387
        %v411 = vadd.f32 %v410, %v389
        %v412 = vadd.f32 %v411, %v391
        %v413 = vrot.slane %v412, 4
        %v414 = vadd.f32 %v412, %v413
        %v415 = vrot.slane %v414, 2
        %v416 = vadd.f32 %v414, %v415
        %v417 = vrot.slane %v416, 1
        %v418 = vadd.f32 %v416, %v417
        %vm421 = vcmask 1041409
        %v422 = vsel %vm421, %v418, %v405
        %v424 = vadd.f32 %v392, %v422
        %425 = vst [vmem:[#allocation2] sm:$0x3] %v424
        %p426 = scmp.eq.s32.totalorder %s26, 3
        // Predicated region
        $region49: #{tpu_custom_call.1} parent=35 // pred_check
          %p427 = pneg %p426
        $region50: #{tpu_custom_call.1} parent=35 // pred_check_branch
          %429 = sbr.rel (%p427) target = $region52
        $region51: #{tpu_custom_call.1} parent=35 // pred_region
          %v430 = vld [vmem:[#allocation2] sm:$0x3]
          %v431 = vmul.f32 %v430, 0.00390625
          %v432 = vlog2.pop %v431
          %v433 = vmul.f32 %v432, 0.6931472
          %v434 = vstv %s278
          %v435 = vrcp.pop %v434
          %v436 = vmul.f32 %v434, %v435
          %v437 = vsub.f32 1.0, %v436
          %v438 = vmul.f32 %v435, %v437
          %v439 = vadd.f32 %v435, %v438
          %vm440 = vweird.f32 %v434
          %vm441 = vweird.f32 %v435
          %vm442 = vmor %vm440, %vm441
          %v443 = vsel %vm442, %v435, %v439
          %v444 = vand.u32 2147483647, %v434
          %vm445 = vcmp.eq.f32.partialorder %v444, 8.507059e+37
          %v446 = vand.u32 %v434, 2147483648
          %v447 = vor.u32 1.1754944e-38, %v446
          %v448 = vsel %vm445, %v447, %v443
          %s449 = vtos %v448
          %v450 = vstv %s449
          %v451 = vmul.f32 %v433, %v450
          %v452 = vmul.f32 %v451, 1.442695
          %v453 = vpow.pop %v452
          %v454 = vld [vmem:[#allocation7] sm:$0xff]
          %v455 = vld [vmem:[#allocation7 + $0x8] sm:$0xff]
          %v456 = vld [vmem:[#allocation7 + $0x10] sm:$0xff]
          %v457 = vld [vmem:[#allocation7 + $0x18] sm:$0xff]
          %v458 = vld [vmem:[#allocation7 + $0x20] sm:$0xff]
          %v459 = vld [vmem:[#allocation7 + $0x28] sm:$0xff]
          %v460 = vld [vmem:[#allocation7 + $0x30] sm:$0xff]
          %v461 = vld [vmem:[#allocation7 + $0x38] sm:$0xff]
          %v462 = vld [vmem:[#allocation7 + $0x40] sm:$0xff]
          %v463 = vld [vmem:[#allocation7 + $0x48] sm:$0xff]
          %v464 = vld [vmem:[#allocation7 + $0x50] sm:$0xff]
          %v465 = vld [vmem:[#allocation7 + $0x58] sm:$0xff]
          %v466 = vld [vmem:[#allocation7 + $0x60] sm:$0xff]
          %v467 = vld [vmem:[#allocation7 + $0x68] sm:$0xff]
          %v468 = vld [vmem:[#allocation7 + $0x70] sm:$0xff]
          %v469 = vld [vmem:[#allocation7 + $0x78] sm:$0xff]
          %v470 = vld [vmem:[%s3] sm:$0x1]
          %v472 = vperm.slane %v470, 0
          %474 = vmatpush.msra.mxu0 %v469
          %475 = vmatpush.msra.mxu0 %v468
          %476 = vmatpush.msra.mxu0 %v467
          %477 = vmatpush.msra.mxu0 %v466
          %478 = vmatpush.msra.mxu0 %v465
          %479 = vmatpush.msra.mxu0 %v464
          %480 = vmatpush.msra.mxu0 %v463
          %481 = vmatpush.msra.mxu0 %v462
          %482 = vmatpush.msra.mxu0 %v461
          %483 = vmatpush.msra.mxu0 %v460
          %484 = vmatpush.msra.mxu0 %v459
          %485 = vmatpush.msra.mxu0 %v458
          %486 = vmatpush.msra.mxu0 %v457
          %487 = vmatpush.msra.mxu0 %v456
          %488 = vmatpush.msra.mxu0 %v455
          %489 = vmatpush.msra.mxu0 %v454
          %490 = vmatmul.f32.gmra.mxu0 %v453
          %v491 = vpop.f32.mrf.mxu0
          %v492 = vadd.f32 %v472, %v491
          %493 = vdwg.mxu0
          %v494 = vmul.f32 %v492, 0.5
          %v495 = vmul.f32 %v492, 0.70710677
          %v496 = vmul.f32 %v495, %v495
          %v497 = vmin.f32 16.0, %v496
          %v498 = vmul.f32 %v497, 2.1237322e-06
          %v499 = vadd.f32 %v498, 0.00028619796
          %v500 = vmul.f32 %v497, %v499
          %v501 = vadd.f32 %v500, 0.0036580483
          %v502 = vmul.f32 %v497, %v501
          %v503 = vadd.f32 %v502, 0.05243302
          %v504 = vmul.f32 %v497, %v503
          %v505 = vadd.f32 %v504, 0.18741608
          %v506 = vmul.f32 %v497, %v505
          %v507 = vadd.f32 %v506, 1.1283791
          %v508 = vmul.f32 %v495, %v507
          %v509 = vmul.f32 %v497, 3.8918573e-05
          %v510 = vadd.f32 %v509, 0.001143296
          %v511 = vmul.f32 %v497, %v510
          %v512 = vadd.f32 %v511, 0.014752088
          %v513 = vmul.f32 %v497, %v512
          %v514 = vadd.f32 %v513, 0.112945676
          %v515 = vmul.f32 %v497, %v514
          %v516 = vadd.f32 %v515, 0.4994258
          %v517 = vmul.f32 %v497, %v516
          %v518 = vadd.f32 %v517, 1.0
          %v519 = vrcp.pop %v518
          %v520 = vmul.f32 %v518, %v519
          %v521 = vsub.f32 1.0, %v520
          %v522 = vmul.f32 %v519, %v521
          %v523 = vadd.f32 %v519, %v522
          %vm524 = vweird.f32 %v518
          %vm525 = vweird.f32 %v519
          %vm526 = vmor %vm524, %vm525
          %v527 = vsel %vm526, %v519, %v523
          %v528 = vand.u32 2147483647, %v518
          %vm529 = vcmp.eq.f32.partialorder %v528, 8.507059e+37
          %v530 = vand.u32 %v518, 2147483648
          %v531 = vor.u32 1.1754944e-38, %v530
          %v532 = vsel %vm529, %v531, %v527
          %v533 = vmul.f32 %v508, %v532
          %v534 = vmin.f32 %v533, 1.0
          %v535 = vmax.f32 %v534, -1.0
          %v536 = vadd.f32 %v535, 1.0
          %v537 = vmul.f32 %v494, %v536
          %538 = vst [vmem:[#allocation9] sm:$0x3] %v537
        $region52: #{tpu_custom_call.1} parent=35 // pred_fallthru
          _
        // Predicated region
        $region53: #{tpu_custom_call.1} parent=35 // pred_check
          %p539 = pneg %p142
        $region54: #{tpu_custom_call.1} parent=35 // pred_check_branch
          %541 = sbr.rel (%p539) target = $region56
        $region55: #{tpu_custom_call.1} parent=35 // pred_region
          %543 = vsyncadd [#allocation6], 0
          %s544 = smul.addr %s25, 2
          %s545 = scalar_lea.hbm %s4, %s544
          %s547 = sshll.u32 [#allocation9], 4
          %s548 = int_to_ptr.vmem [resolvable:$true] %s547
          %s549 = sshll.u32 %s545, 4
          %s550 = int_to_ptr.hbm [resolvable:$true] %s549
          %552 = dma.vmem_to_hbm [thread:$0]  %s548, 32, %s550, [#allocation6]
        $region56: #{tpu_custom_call.1} parent=35 // pred_fallthru
          _
        // Predicated region
        $region57: #{tpu_custom_call.1} parent=35 // pred_check
          %p553 = pneg %p142
        $region58: #{tpu_custom_call.1} parent=35 // pred_check_branch
          %555 = sbr.rel (%p553) target = $region60
        $region59: #{tpu_custom_call.1} parent=35 // pred_region
          %557 = dma.done [#allocation6], 32
        $region60: #{tpu_custom_call.1} parent=35 // pred_fallthru
          _
      $region36: #{tpu_custom_call.1} parent=5 // pred_fallthru
        _
      %p558 = scmp.le.s32.totalorder 2, %s16
      // Predicated region
      $region61: #{tpu_custom_call.1} parent=5 // pred_check
        %p559 = pneg %p558
      $region62: #{tpu_custom_call.1} parent=5 // pred_check_branch
        %561 = sbr.rel (%p559) target = $region64
      $region63: #{tpu_custom_call.1} parent=5 // pred_region
        %s562 = ssub.s32 %s16, 2
      $region64: #{tpu_custom_call.1} parent=5 // pred_fallthru
        _
    $region6: #{tpu_custom_call.1} parent=1 // loop_footer
      %s20 = sadd.s32 1, %s16
    $region7: #{tpu_custom_call.1} parent=1 // loop_footer_branch
      %15 = sbr.rel target = $region3
    $region8: #{tpu_custom_call.1} parent=1 // loop_exit
      _
    %563 = vsyncpa [#allocation5], 1
    %s564 = scalar_lea.sflag [#allocation5], 1
    %565 = vsyncpa %s564, 1
    %566 = vsyncpa [#allocation8], 1
    %567 = vsyncpa [#allocation6], 1
    %s568 = scalar_lea.sflag [#allocation6], 1
    %569 = vsyncpa %s568, 1

</llo_original>
